<compile_context>
chip_gen: v7x
topology: tpu7x:2x2x1
jax: 0.10.0
libtpu: 0.0.40
codegen_flags: <defaults>
</compile_context>

<pallas_src>
import math
import functools

import jax
import jax.numpy as jnp
from jax.experimental import pallas as pl
from jax.experimental.pallas import tpu as pltpu


def _round_up(x: int, m: int) -> int:
    return ((x + m - 1) // m) * m


def _scorer_selector_kernel(q_ref, k_ref, v_ref, sel_ref, w_ref, b_ref, o_ref):
    """One batch block of ScorerSelector.

    q_ref:   (TB, E)     queries for this block
    k_ref:   (TB, S, E)  keys for this block
    v_ref:   (S, E)      precomputed value projection scorers @ Wv^T + bv (grid-invariant)
    sel_ref: (E, H)      0/1 head selector: sel[e, h] = 1 iff lane e belongs to head h
    w_ref:   (3E, E)     packed rows [Wq^T * scale ; Wk^T ; Wo^T]
    b_ref:   (3, E)      packed rows [bq * scale ; bk ; bo]
    o_ref:   (TB, E)
    """
    TB, E = q_ref.shape
    S = k_ref.shape[1]
    H = sel_ref.shape[1]

    sel = sel_ref[...]                                                         # (E, H)

    # Input projections (attention scale already folded into Wq / bq).
    q = jnp.dot(q_ref[...], w_ref[0:E, :],
                preferred_element_type=jnp.float32) + b_ref[0:1, :]            # (TB, E)
    k = jnp.dot(k_ref[...].reshape(TB * S, E), w_ref[E:2 * E, :],
                preferred_element_type=jnp.float32) + b_ref[1:2, :]            # (TB*S, E)
    k = k.reshape(TB, S, E)

    # All-head scores at once: broadcasted VPU product + one tiny selector matmul.
    prod = q[:, None, :] * k                                                   # (TB, S, E)
    scores = jnp.dot(prod.reshape(TB * S, E), sel,
                     preferred_element_type=jnp.float32).reshape(TB, S, H)     # (TB, S, H)

    # Softmax over the key/sequence axis (per example, per head), stabilized.
    m = jnp.max(scores, axis=1, keepdims=True)                                 # (TB, 1, H)
    p = jnp.exp(scores - m)                                                    # (TB, S, H)
    denom = jnp.sum(p, axis=1, keepdims=True)                                  # (TB, 1, H)
    attn = p * pl.reciprocal(denom, approx=True)                               # (TB, S, H)
    # TODO(synk): attention-weight dropout omitted (eval / inference semantics).

    # Expand per-head weights back to lane width (attn @ sel^T), weight the shared
    # values, and reduce over S -> concatenated head outputs.
    attn_full = jax.lax.dot_general(
        attn.reshape(TB * S, H), sel, (((1,), (1,)), ((), ())),
        preferred_element_type=jnp.float32).reshape(TB, S, E)                  # (TB, S, E)
    o_concat = jnp.sum(attn_full * v_ref[...][None, :, :], axis=1)             # (TB, E)

    # Output projection (single fused K=E matmul).
    o_ref[...] = jnp.dot(o_concat, w_ref[2 * E:3 * E, :],
                         preferred_element_type=jnp.float32) + b_ref[2:3, :]


def prepare_params(params, *, num_heads):
    """One-time packing of module parameters (kept OUT of the per-call path)."""
    E = params["out_proj_weight"].shape[0]
    assert E % num_heads == 0, "embed_dim must be divisible by num_heads"
    assert E % 8 == 0, "embed_dim must be a multiple of 8 (sublane-aligned weight slices)"
    Dh = E // num_heads
    scale = 1.0 / math.sqrt(Dh)

    wq, wk, wv = jnp.split(params["in_proj_weight"].astype(jnp.float32), 3, axis=0)
    bq, bk, bv = jnp.split(params["in_proj_bias"].astype(jnp.float32), 3)
    wo = params["out_proj_weight"].astype(jnp.float32)
    bo = params["out_proj_bias"].astype(jnp.float32)
    scorers = params["scorers"].reshape(-1, E).astype(jnp.float32)             # (S, E)

    # Value projection is input-independent (scorers are parameters) -> hoist it.
    v_proj = scorers @ wv.T + bv                                               # (S, E)

    # Packed, pre-transposed weights: kernel does plain (M,K)@(K,N) matmuls.
    w = jnp.concatenate([wq.T * scale, wk.T, wo.T], axis=0)                    # (3E, E)
    b = jnp.stack([bq * scale, bk, bo], axis=0)                                # (3, E)

    # 0/1 head selector: sel[e, h] = 1 iff lane e belongs to head h.
    e_idx = jnp.arange(E)[:, None]
    h_idx = jnp.arange(num_heads)[None, :]
    sel = (e_idx // Dh == h_idx).astype(jnp.float32)                           # (E, H)

    return {"w": w, "b": b, "v": v_proj, "sel": sel}


@functools.partial(jax.jit, static_argnames=("block_b",))
def scorer_selector_forward_batched(queries, keys, packed, *, block_b=None):
    """queries: (B, E), keys: (B, S, E). Returns (B, E)."""
    B, E = queries.shape
    S = keys.shape[1]
    assert packed["v"].shape == (S, E), \
        "nn.MultiheadAttention requires num_scorers == key sequence length"
    H = packed["sel"].shape[1]

    if block_b is None:
        # Single block for small batches; otherwise ~2 blocks so the "parallel" grid
        # axis can shard across v7x's 2 TensorCores.  Cap the block to keep per-step
        # VMEM small (it is KB..MB scale — far under any generation's limit).
        block_b = B if B <= 128 else -(-B // 2)
        block_b = min(block_b, 512)
    tb = max(8, _round_up(block_b, 8))          # full-sublane output stores
    Bp = _round_up(max(B, 1), tb)

    q = queries.astype(jnp.float32)
    k = keys.astype(jnp.float32)
    if Bp != B:
        q = jnp.pad(q, ((0, Bp - B), (0, 0)))
        k = jnp.pad(k, ((0, Bp - B), (0, 0), (0, 0)))

    out = pl.pallas_call(
        _scorer_selector_kernel,
        out_shape=jax.ShapeDtypeStruct((Bp, E), jnp.float32),
        grid=(Bp // tb,),
        in_specs=[
            pl.BlockSpec((tb, E), lambda i: (i, 0)),          # queries (per block)
            pl.BlockSpec((tb, S, E), lambda i: (i, 0, 0)),    # keys    (per block)
            pl.BlockSpec((S, E), lambda i: (0, 0)),           # value proj (grid-invariant)
            pl.BlockSpec((E, H), lambda i: (0, 0)),           # head selector
            pl.BlockSpec((3 * E, E), lambda i: (0, 0)),       # packed weights
            pl.BlockSpec((3, E), lambda i: (0, 0)),           # packed biases
        ],
        out_specs=pl.BlockSpec((tb, E), lambda i: (i, 0)),
        compiler_params=pltpu.CompilerParams(dimension_semantics=("parallel",)),
    )(q, k, packed["v"], packed["sel"], packed["w"], packed["b"])
    return out[:B]


@jax.jit
def scorer_selector_forward(query, key, packed):
    """Module semantics: query (E,), key (S, E) -> (E,)."""
    E = query.shape[-1]
    S = key.shape[0]
    out = scorer_selector_forward_batched(query.reshape(1, E), key.reshape(1, S, E), packed)
    return out.reshape(E)


def _reference_forward(query, key, params, *, num_heads):
    """Plain-JAX reference of the PyTorch forward (eval mode)."""
    E = query.shape[-1]
    Dh = E // num_heads
    wq, wk, wv = jnp.split(params["in_proj_weight"], 3, axis=0)
    bq, bk, bv = jnp.split(params["in_proj_bias"], 3)
    q = query.reshape(1, E) @ wq.T + bq
    k = key @ wk.T + bk
    v = params["scorers"].reshape(-1, E) @ wv.T + bv
    outs = []
    for h in range(num_heads):
        sl = slice(h * Dh, (h + 1) * Dh)
        scores = (q[:, sl] @ k[:, sl].T) / math.sqrt(Dh)
        attn = jax.nn.softmax(scores, axis=-1)
        outs.append(attn @ v[:, sl])
    concat = jnp.concatenate(outs, axis=-1)
    return (concat @ params["out_proj_weight"].T + params["out_proj_bias"]).reshape(-1)


def init_params(key, embed_dim, num_scorers):
    """Deterministic synthetic init (shapes match nn.MultiheadAttention + scorers)."""
    k1, k2, k3 = jax.random.split(key, 3)
    bound = 1.0 / math.sqrt(embed_dim)
    return {
        "in_proj_weight": jax.random.uniform(k1, (3 * embed_dim, embed_dim),
                                             jnp.float32, -bound, bound),
        "in_proj_bias": jnp.zeros((3 * embed_dim,), jnp.float32),
        "out_proj_weight": jax.random.uniform(k2, (embed_dim, embed_dim),
                                              jnp.float32, -bound, bound),
        "out_proj_bias": jnp.zeros((embed_dim,), jnp.float32),
        # kaiming_uniform_(a=sqrt(5)) on (num_scorers, 1, E) -> bound = 1/sqrt(E)
        "scorers": jax.random.uniform(k3, (num_scorers, 1, embed_dim),
                                      jnp.float32, -bound, bound),
    }


if __name__ == "__main__":
    embed_dim = 32
    num_heads = 4
    num_scorers = 8          # must equal key.shape[0] (key/value seq-len constraint)
    batch = 4

    root = jax.random.PRNGKey(0)
    kp, kq, kk, kbq, kbk, kmq, kmk = jax.random.split(root, 7)
    params = init_params(kp, embed_dim, num_scorers)
    packed = prepare_params(params, num_heads=num_heads)   # one-time packing

    # --- module-semantics single query ---
    query = jax.random.normal(kq, (embed_dim,), jnp.float32)
    key_in = jax.random.normal(kk, (num_scorers, embed_dim), jnp.float32)
    out = jax.block_until_ready(scorer_selector_forward(query, key_in, packed))
    ref = _reference_forward(query, key_in, params, num_heads=num_heads)
    assert out.shape == (embed_dim,)
    # tolerance covers the EUP approximate reciprocal used in the softmax
    assert jnp.allclose(out, ref, rtol=2e-3, atol=2e-3), (out, ref)

    # --- batched path (single TB block, padded to full sublanes) ---
    queries = jax.random.normal(kbq, (batch, embed_dim), jnp.float32)
    keys = jax.random.normal(kbk, (batch, num_scorers, embed_dim), jnp.float32)
    outs = jax.block_until_ready(scorer_selector_forward_batched(queries, keys, packed))
    refs = jnp.stack([_reference_forward(queries[b], keys[b], params, num_heads=num_heads)
                      for b in range(batch)])
    assert outs.shape == (batch, embed_dim)
    assert jnp.allclose(outs, refs, rtol=2e-3, atol=2e-3), (outs, refs)

    # --- multi-block grid (exercises TB blocking, padding and the parallel grid) ---
    B2 = 20
    queries2 = jax.random.normal(kmq, (B2, embed_dim), jnp.float32)
    keys2 = jax.random.normal(kmk, (B2, num_scorers, embed_dim), jnp.float32)
    outs2 = jax.block_until_ready(
        scorer_selector_forward_batched(queries2, keys2, packed, block_b=8))
    refs2 = jnp.stack([_reference_forward(queries2[b], keys2[b], params, num_heads=num_heads)
                       for b in range(B2)])
    assert outs2.shape == (B2, embed_dim)
    assert jnp.allclose(outs2, refs2, rtol=2e-3, atol=2e-3), (outs2, refs2)

    print("KERNEL_OK")
</pallas_src>

<mosaic_0001>
module attributes {stable_mosaic.version = 11 : i64} {
  func.func @_scorer_selector_kernel(%arg0: i32, %arg1: memref<8x32xf32, #tpu.memory_space<vmem>>, %arg2: memref<8x8x32xf32, #tpu.memory_space<vmem>>, %arg3: memref<8x32xf32, #tpu.memory_space<vmem>>, %arg4: memref<32x4xf32, #tpu.memory_space<vmem>>, %arg5: memref<96x32xf32, #tpu.memory_space<vmem>>, %arg6: memref<3x32xf32, #tpu.memory_space<vmem>>, %arg7: memref<8x32xf32, #tpu.memory_space<vmem>>) attributes {dimension_semantics = [#tpu.dimension_semantics<parallel>], iteration_bounds = array<i64: 1>, scalar_prefetch = 0 : i64, scratch_operands = 0 : i64, tpu.core_type = #tpu.core_type<tc>, window_params = [{transform_indices = @transform_0, window_bounds = array<i64: 8, 32>}, {transform_indices = @transform_1, window_bounds = array<i64: 8, 8, 32>}, {pipeline_mode = #tpu.pipeline_mode<synchronous>, transform_indices = @transform_2, window_bounds = array<i64: 8, 32>}, {pipeline_mode = #tpu.pipeline_mode<synchronous>, transform_indices = @transform_3, window_bounds = array<i64: 32, 4>}, {pipeline_mode = #tpu.pipeline_mode<synchronous>, transform_indices = @transform_4, window_bounds = array<i64: 96, 32>}, {pipeline_mode = #tpu.pipeline_mode<synchronous>, transform_indices = @transform_5, window_bounds = array<i64: 3, 32>}, {transform_indices = @transform_6, window_bounds = array<i64: 8, 32>}]} {
    %c0 = arith.constant 0 : index
    %c0_0 = arith.constant 0 : index
    %0 = vector.load %arg4[%c0, %c0_0] : memref<32x4xf32, #tpu.memory_space<vmem>>, vector<32x4xf32>
    %c0_1 = arith.constant 0 : index
    %c0_2 = arith.constant 0 : index
    %1 = vector.load %arg1[%c0_1, %c0_2] : memref<8x32xf32, #tpu.memory_space<vmem>>, vector<8x32xf32>
    %c0_3 = arith.constant 0 : index
    %c0_4 = arith.constant 0 : index
    %2 = vector.load %arg5[%c0_3, %c0_4] : memref<96x32xf32, #tpu.memory_space<vmem>>, vector<32x32xf32>
    %cst = arith.constant dense<0.000000e+00> : vector<8x32xf32>
    %3 = tpu.matmul %1, %2, %cst {dimension_numbers = #tpu.dot_dimension_numbers<[1], [0], [0], [1], [0, 0, 1, 1], [], []>} : vector<8x32xf32>, vector<32x32xf32>, vector<8x32xf32> -> vector<8x32xf32>
    %c0_5 = arith.constant 0 : index
    %c0_6 = arith.constant 0 : index
    %4 = vector.load %arg6[%c0_5, %c0_6] : memref<3x32xf32, #tpu.memory_space<vmem>>, vector<1x32xf32>
    %5 = vector.broadcast %4 : vector<1x32xf32> to vector<8x32xf32>
    %6 = arith.addf %3, %5 : vector<8x32xf32>
    %c0_7 = arith.constant 0 : index
    %c0_8 = arith.constant 0 : index
    %c0_9 = arith.constant 0 : index
    %7 = vector.load %arg2[%c0_7, %c0_8, %c0_9] : memref<8x8x32xf32, #tpu.memory_space<vmem>>, vector<8x8x32xf32>
    %8 = vector.shape_cast %7 : vector<8x8x32xf32> to vector<64x32xf32>
    %c32 = arith.constant 32 : index
    %c0_10 = arith.constant 0 : index
    %9 = vector.load %arg5[%c32, %c0_10] : memref<96x32xf32, #tpu.memory_space<vmem>>, vector<32x32xf32>
    %cst_11 = arith.constant dense<0.000000e+00> : vector<64x32xf32>
    %10 = tpu.matmul %8, %9, %cst_11 {dimension_numbers = #tpu.dot_dimension_numbers<[1], [0], [0], [1], [0, 0, 1, 1], [], []>} : vector<64x32xf32>, vector<32x32xf32>, vector<64x32xf32> -> vector<64x32xf32>
    %c1 = arith.constant 1 : index
    %c0_12 = arith.constant 0 : index
    %11 = vector.load %arg6[%c1, %c0_12] : memref<3x32xf32, #tpu.memory_space<vmem>>, vector<1x32xf32>
    %12 = vector.broadcast %11 : vector<1x32xf32> to vector<64x32xf32>
    %13 = arith.addf %10, %12 : vector<64x32xf32>
    %14 = vector.shape_cast %13 : vector<64x32xf32> to vector<8x8x32xf32>
    %15 = vector.shape_cast %6 : vector<8x32xf32> to vector<8x1x32xf32>
    %16 = vector.broadcast %15 : vector<8x1x32xf32> to vector<8x8x32xf32>
    %17 = arith.mulf %16, %14 : vector<8x8x32xf32>
    %18 = vector.shape_cast %17 : vector<8x8x32xf32> to vector<64x32xf32>
    %cst_13 = arith.constant dense<0.000000e+00> : vector<64x4xf32>
    %19 = tpu.matmul %18, %0, %cst_13 {dimension_numbers = #tpu.dot_dimension_numbers<[1], [0], [0], [1], [0, 0, 1, 1], [], []>} : vector<64x32xf32>, vector<32x4xf32>, vector<64x4xf32> -> vector<64x4xf32>
    %20 = vector.shape_cast %19 : vector<64x4xf32> to vector<8x8x4xf32>
    %cst_14 = arith.constant dense<0xFF800000> : vector<8x4xf32>
    %21 = vector.multi_reduction <maximumf>, %20, %cst_14 [1] : vector<8x8x4xf32> to vector<8x4xf32>
    %22 = vector.shape_cast %21 : vector<8x4xf32> to vector<8x1x4xf32>
    %23 = vector.broadcast %22 : vector<8x1x4xf32> to vector<8x8x4xf32>
    %24 = arith.subf %20, %23 : vector<8x8x4xf32>
    %25 = math.exp %24 : vector<8x8x4xf32>
    %cst_15 = arith.constant dense<0.000000e+00> : vector<8x4xf32>
    %26 = vector.multi_reduction <add>, %25, %cst_15 [1] : vector<8x8x4xf32> to vector<8x4xf32>
    %27 = vector.shape_cast %26 : vector<8x4xf32> to vector<8x1x4xf32>
    %28 = tpu.reciprocal %27 {approx = true} : vector<8x1x4xf32> -> vector<8x1x4xf32>
    %29 = vector.broadcast %28 : vector<8x1x4xf32> to vector<8x8x4xf32>
    %30 = arith.mulf %25, %29 : vector<8x8x4xf32>
    %31 = vector.shape_cast %30 : vector<8x8x4xf32> to vector<64x4xf32>
    %cst_16 = arith.constant dense<0.000000e+00> : vector<64x32xf32>
    %32 = tpu.matmul %31, %0, %cst_16 {dimension_numbers = #tpu.dot_dimension_numbers<[1], [1], [0], [0], [0, 0, 1, 0], [], []>} : vector<64x4xf32>, vector<32x4xf32>, vector<64x32xf32> -> vector<64x32xf32>
    %33 = vector.shape_cast %32 : vector<64x32xf32> to vector<8x8x32xf32>
    %c0_17 = arith.constant 0 : index
    %c0_18 = arith.constant 0 : index
    %34 = vector.load %arg3[%c0_17, %c0_18] : memref<8x32xf32, #tpu.memory_space<vmem>>, vector<8x32xf32>
    %35 = vector.shape_cast %34 : vector<8x32xf32> to vector<1x8x32xf32>
    %36 = vector.broadcast %35 : vector<1x8x32xf32> to vector<8x8x32xf32>
    %37 = arith.mulf %33, %36 : vector<8x8x32xf32>
    %cst_19 = arith.constant dense<0.000000e+00> : vector<8x32xf32>
    %38 = vector.multi_reduction <add>, %37, %cst_19 [1] : vector<8x8x32xf32> to vector<8x32xf32>
    %c64 = arith.constant 64 : index
    %c0_20 = arith.constant 0 : index
    %39 = vector.load %arg5[%c64, %c0_20] : memref<96x32xf32, #tpu.memory_space<vmem>>, vector<32x32xf32>
    %cst_21 = arith.constant dense<0.000000e+00> : vector<8x32xf32>
    %40 = tpu.matmul %38, %39, %cst_21 {dimension_numbers = #tpu.dot_dimension_numbers<[1], [0], [0], [1], [0, 0, 1, 1], [], []>} : vector<8x32xf32>, vector<32x32xf32>, vector<8x32xf32> -> vector<8x32xf32>
    %c2 = arith.constant 2 : index
    %c0_22 = arith.constant 0 : index
    %41 = vector.load %arg6[%c2, %c0_22] : memref<3x32xf32, #tpu.memory_space<vmem>>, vector<1x32xf32>
    %42 = vector.broadcast %41 : vector<1x32xf32> to vector<8x32xf32>
    %43 = arith.addf %40, %42 : vector<8x32xf32>
    %c0_23 = arith.constant 0 : index
    %c0_24 = arith.constant 0 : index
    %44 = vector.load %arg7[%c0_23, %c0_24] : memref<8x32xf32, #tpu.memory_space<vmem>>, vector<8x32xf32>
    tpu.vector_store %arg7[%c0_23, %c0_24], %43 {strides = array<i32>} : memref<8x32xf32, #tpu.memory_space<vmem>>, vector<8x32xf32>,
    return
  }
  func.func @transform_0(%arg0: i32) -> (i32, i32) {
    %c0_i32 = arith.constant 0 : i32
    %c0_i32_0 = arith.constant 0 : i32
    return %arg0, %c0_i32 : i32, i32
  }
  func.func @transform_1(%arg0: i32) -> (i32, i32, i32) {
    %c0_i32 = arith.constant 0 : i32
    %c0_i32_0 = arith.constant 0 : i32
    %c0_i32_1 = arith.constant 0 : i32
    return %arg0, %c0_i32, %c0_i32_0 : i32, i32, i32
  }
  func.func @transform_2(%arg0: i32) -> (i32, i32) {
    %c0_i32 = arith.constant 0 : i32
    %c0_i32_0 = arith.constant 0 : i32
    %c0_i32_1 = arith.constant 0 : i32
    return %c0_i32, %c0_i32_0 : i32, i32
  }
  func.func @transform_3(%arg0: i32) -> (i32, i32) {
    %c0_i32 = arith.constant 0 : i32
    %c0_i32_0 = arith.constant 0 : i32
    %c0_i32_1 = arith.constant 0 : i32
    return %c0_i32, %c0_i32_0 : i32, i32
  }
  func.func @transform_4(%arg0: i32) -> (i32, i32) {
    %c0_i32 = arith.constant 0 : i32
    %c0_i32_0 = arith.constant 0 : i32
    %c0_i32_1 = arith.constant 0 : i32
    return %c0_i32, %c0_i32_0 : i32, i32
  }
  func.func @transform_5(%arg0: i32) -> (i32, i32) {
    %c0_i32 = arith.constant 0 : i32
    %c0_i32_0 = arith.constant 0 : i32
    %c0_i32_1 = arith.constant 0 : i32
    return %c0_i32, %c0_i32_0 : i32, i32
  }
  func.func @transform_6(%arg0: i32) -> (i32, i32) {
    %c0_i32 = arith.constant 0 : i32
    %c0_i32_0 = arith.constant 0 : i32
    return %arg0, %c0_i32 : i32, i32
  }
}

</mosaic_0001>

<llo_original>
// kernel: scorer_selector_forward_batched.1
$region0: #{scorer_selector_forward_batched.1}
  #allocation0 [shape = 'u32[]', space=smem, size = 0x4, offset = 0x4, fixed_abs, tag = 'smem constant byte address 0x4 - core index']
  #allocation1 [shape = 'u32[144,128]{1,0:T(1,128)}', space=vmem, size = 0x12000, scoped, tag = 'internal scratch']
  %s0 = inlined_call_operand.vmem [shape: f32[8,32], index: 0, kind: input, shape index: {}]
  %s1 = inlined_call_operand.vmem [shape: f32[8,8,32], index: 1, kind: input, shape index: {}]
  %s2 = inlined_call_operand.vmem [shape: f32[8,32], index: 2, kind: input, shape index: {}]
  %s3 = inlined_call_operand.vmem [shape: f32[32,4], index: 3, kind: input, shape index: {}]
  %s4 = inlined_call_operand.vmem [shape: f32[96,32], index: 4, kind: input, shape index: {}]
  %s5 = inlined_call_operand.vmem [shape: f32[3,32], index: 5, kind: input, shape index: {}]
  %s6 = inlined_call_operand.vmem [shape: f32[8,32], index: 6, kind: output, shape index: {}]
  %s7 = sld [smem:[#allocation0]]
  $region34: #{scorer_selector_forward_batched.1} parent=0
    _
  %s9 = ssub.s32 1, %s7
  %s10 = scalar_select 0, %s9, %s7
  // Predicated region
  $region2: #{scorer_selector_forward_batched.1} parent=0 // pred_check
    _
  $region3: #{scorer_selector_forward_batched.1} parent=0 // pred_check_branch
    %12 = sbr.rel (0) target = $region5
  $region4: #{scorer_selector_forward_batched.1} parent=0 // pred_region
    _
  $region5: #{scorer_selector_forward_batched.1} parent=0 // pred_fallthru
    _
  // Predicated region
  $region6: #{scorer_selector_forward_batched.1} parent=0 // pred_check
    _
  $region7: #{scorer_selector_forward_batched.1} parent=0 // pred_check_branch
    %14 = sbr.rel (0) target = $region9
  $region8: #{scorer_selector_forward_batched.1} parent=0 // pred_region
    _
  $region9: #{scorer_selector_forward_batched.1} parent=0 // pred_fallthru
    _
  // Predicated region
  $region10: #{scorer_selector_forward_batched.1} parent=0 // pred_check
    _
  $region11: #{scorer_selector_forward_batched.1} parent=0 // pred_check_branch
    %16 = sbr.rel (0) target = $region13
  $region12: #{scorer_selector_forward_batched.1} parent=0 // pred_region
    _
  $region13: #{scorer_selector_forward_batched.1} parent=0 // pred_fallthru
    _
  // Predicated region
  $region14: #{scorer_selector_forward_batched.1} parent=0 // pred_check
    _
  $region15: #{scorer_selector_forward_batched.1} parent=0 // pred_check_branch
    %18 = sbr.rel (0) target = $region17
  $region16: #{scorer_selector_forward_batched.1} parent=0 // pred_region
    _
  $region17: #{scorer_selector_forward_batched.1} parent=0 // pred_fallthru
    _
  // Predicated region
  $region18: #{scorer_selector_forward_batched.1} parent=0 // pred_check
    _
  $region19: #{scorer_selector_forward_batched.1} parent=0 // pred_check_branch
    %20 = sbr.rel (0) target = $region21
  $region20: #{scorer_selector_forward_batched.1} parent=0 // pred_region
    _
  $region21: #{scorer_selector_forward_batched.1} parent=0 // pred_fallthru
    _
  // Predicated region
  $region22: #{scorer_selector_forward_batched.1} parent=0 // pred_check
    _
  $region23: #{scorer_selector_forward_batched.1} parent=0 // pred_check_branch
    %22 = sbr.rel (0) target = $region25
  $region24: #{scorer_selector_forward_batched.1} parent=0 // pred_region
    _
  $region25: #{scorer_selector_forward_batched.1} parent=0 // pred_fallthru
    _
  %v23 = vld [vmem:[%s3] sm:$0xff]
  %v24 = vld [vmem:[%s3 + $0x8] sm:$0xff]
  %v25 = vld [vmem:[%s3 + $0x10] sm:$0xff]
  %v26 = vld [vmem:[%s3 + $0x18] sm:$0xff]
  %v27 = vld [vmem:[%s0] sm:$0xff]
  %v28 = vld [vmem:[%s4] sm:$0xff]
  %v29 = vld [vmem:[%s4 + $0x8] sm:$0xff]
  %v30 = vld [vmem:[%s4 + $0x10] sm:$0xff]
  %v31 = vld [vmem:[%s4 + $0x18] sm:$0xff]
  %v32 = vld [vmem:[%s5] sm:$0x1]
  %v33 = vlaneseq
  %v34 = vshrl.u32 %v33, 7
  %v35 = vsub.s32 0, %v34
  %v36 = vrot.slane %v32, %v35
  %vm37 = vcmask 261120
  %v39 = vsel %vm37, %v27, 0
  %41 = vmatprep.subr.mxu0 0.0
  %42 = vmatpush1.msra.mxu0 %v28
  %43 = vmatprep.subr.mxu0 0.0
  %44 = vmatpush1.msra.mxu0 %v29
  %45 = vmatprep.subr.mxu0 0.0
  %46 = vmatpush1.msra.mxu0 %v30
  %47 = vmatprep.subr.mxu0 0.0
  %48 = vmatpush1.msra.mxu0 %v31
  %49 = vmatprep.subr.mxu0 0.0
  %50 = vmatpush1.msra.mxu0 0.0
  %51 = vmatprep.subr.mxu0 0.0
  %52 = vmatpush1.msra.mxu0 0.0
  %53 = vmatprep.subr.mxu0 0.0
  %54 = vmatpush1.msra.mxu0 0.0
  %55 = vmatprep.subr.mxu0 0.0
  %56 = vmatpush1.msra.mxu0 0.0
  %57 = vmatprep.subr.mxu0 0.0
  %58 = vmatpush1.msra.mxu0 0.0
  %59 = vmatprep.subr.mxu0 0.0
  %60 = vmatpush1.msra.mxu0 0.0
  %61 = vmatprep.subr.mxu0 0.0
  %62 = vmatpush1.msra.mxu0 0.0
  %63 = vmatprep.subr.mxu0 0.0
  %64 = vmatpush1.msra.mxu0 0.0
  %65 = vmatprep.subr.mxu0 0.0
  %66 = vmatpush1.msra.mxu0 0.0
  %67 = vmatprep.subr.mxu0 0.0
  %68 = vmatpush1.msra.mxu0 0.0
  %69 = vmatprep.subr.mxu0 0.0
  %70 = vmatpush1.msra.mxu0 0.0
  %71 = vmatprep.subr.mxu0 0.0
  %72 = vmatpush1.msra.mxu0 0.0
  %73 = vmatprep.subr.mxu0 0.0
  %74 = vmatpush1.msra.mxu0 0.0
  %75 = vmatprep.subr.mxu0 0.0
  %76 = vmatpush1.msra.mxu0 0.0
  %77 = vmatprep.subr.mxu0 0.0
  %78 = vmatpush1.msra.mxu0 0.0
  %79 = vmatprep.subr.mxu0 0.0
  %80 = vmatpush1.msra.mxu0 0.0
  %81 = vmatprep.subr.mxu0 0.0
  %82 = vmatpush1.msra.mxu0 0.0
  %83 = vmatprep.subr.mxu0 0.0
  %84 = vmatpush1.msra.mxu0 0.0
  %85 = vmatprep.subr.mxu0 0.0
  %86 = vmatpush1.msra.mxu0 0.0
  %87 = vmatprep.subr.mxu0 0.0
  %88 = vmatpush1.msra.mxu0 0.0
  %89 = vmatprep.subr.mxu0 0.0
  %90 = vmatpush1.msra.mxu0 0.0
  %91 = vmatprep.subr.mxu0 0.0
  %92 = vmatpush1.msra.mxu0 0.0
  %93 = vmatprep.subr.mxu0 0.0
  %94 = vmatpush1.msra.mxu0 0.0
  %95 = vmatprep.subr.mxu0 0.0
  %96 = vmatpush1.msra.mxu0 0.0
  %97 = vmatprep.subr.mxu0 0.0
  %98 = vmatpush1.msra.mxu0 0.0
  %99 = vmatprep.subr.mxu0 0.0
  %100 = vmatpush1.msra.mxu0 0.0
  %101 = vmatprep.subr.mxu0 0.0
  %102 = vmatpush1.msra.mxu0 0.0
  %103 = vmatprep.subr.mxu0 0.0
  %104 = vmatpush1.msra.mxu0 0.0
  %105 = vmatprep.mubr.f32.mxu0 0.0
  %106 = vmatmul.mubr.f32.gmra.mrb[0].mxu0 %v39
  %v107 = vpop.f32.mrb[0].mxu0
  %v108 = vadd.f32 %v36, %v107
  %v109 = vpop.f32.mrb[0].mxu0
  %110 = vdwg.mxu0
  %v111 = vld [vmem:[%s1] sm:$0xff]
  %v112 = vld [vmem:[%s1 + $0x8] sm:$0xff]
  %v113 = vld [vmem:[%s1 + $0x10] sm:$0xff]
  %v114 = vld [vmem:[%s1 + $0x18] sm:$0xff]
  %v115 = vld [vmem:[%s1 + $0x20] sm:$0xff]
  %v116 = vld [vmem:[%s1 + $0x28] sm:$0xff]
  %v117 = vld [vmem:[%s1 + $0x30] sm:$0xff]
  %v118 = vld [vmem:[%s1 + $0x38] sm:$0xff]
  %v119 = vld [vmem:[%s4 + $0x20] sm:$0xff]
  %v120 = vld [vmem:[%s4 + $0x28] sm:$0xff]
  %v121 = vld [vmem:[%s4 + $0x30] sm:$0xff]
  %v122 = vld [vmem:[%s4 + $0x38] sm:$0xff]
  %v123 = vld [vmem:[%s5 + $0x1] sm:$0x1]
  %v124 = vlaneseq
  %v125 = vshrl.u32 %v124, 7
  %v126 = vsub.s32 0, %v125
  %v127 = vrot.slane %v123, %v126
  %v129 = vsel %vm37, %v111, 0
  %v132 = vsel %vm37, %v112, 0
  %v135 = vsel %vm37, %v113, 0
  %v138 = vsel %vm37, %v114, 0
  %v141 = vsel %vm37, %v115, 0
  %v144 = vsel %vm37, %v116, 0
  %v147 = vsel %vm37, %v117, 0
  %v150 = vsel %vm37, %v118, 0
  %152 = vmatprep.subr.mxu0 0.0
  %153 = vmatpush1.msra.mxu0 %v119
  %154 = vmatprep.subr.mxu0 0.0
  %155 = vmatpush1.msra.mxu0 %v120
  %156 = vmatprep.subr.mxu0 0.0
  %157 = vmatpush1.msra.mxu0 %v121
  %158 = vmatprep.subr.mxu0 0.0
  %159 = vmatpush1.msra.mxu0 %v122
  %160 = vmatprep.subr.mxu0 0.0
  %161 = vmatpush1.msra.mxu0 0.0
  %162 = vmatprep.subr.mxu0 0.0
  %163 = vmatpush1.msra.mxu0 0.0
  %164 = vmatprep.subr.mxu0 0.0
  %165 = vmatpush1.msra.mxu0 0.0
  %166 = vmatprep.subr.mxu0 0.0
  %167 = vmatpush1.msra.mxu0 0.0
  %168 = vmatprep.subr.mxu0 0.0
  %169 = vmatpush1.msra.mxu0 0.0
  %170 = vmatprep.subr.mxu0 0.0
  %171 = vmatpush1.msra.mxu0 0.0
  %172 = vmatprep.subr.mxu0 0.0
  %173 = vmatpush1.msra.mxu0 0.0
  %174 = vmatprep.subr.mxu0 0.0
  %175 = vmatpush1.msra.mxu0 0.0
  %176 = vmatprep.subr.mxu0 0.0
  %177 = vmatpush1.msra.mxu0 0.0
  %178 = vmatprep.subr.mxu0 0.0
  %179 = vmatpush1.msra.mxu0 0.0
  %180 = vmatprep.subr.mxu0 0.0
  %181 = vmatpush1.msra.mxu0 0.0
  %182 = vmatprep.subr.mxu0 0.0
  %183 = vmatpush1.msra.mxu0 0.0
  %184 = vmatprep.subr.mxu0 0.0
  %185 = vmatpush1.msra.mxu0 0.0
  %186 = vmatprep.subr.mxu0 0.0
  %187 = vmatpush1.msra.mxu0 0.0
  %188 = vmatprep.subr.mxu0 0.0
  %189 = vmatpush1.msra.mxu0 0.0
  %190 = vmatprep.subr.mxu0 0.0
  %191 = vmatpush1.msra.mxu0 0.0
  %192 = vmatprep.subr.mxu0 0.0
  %193 = vmatpush1.msra.mxu0 0.0
  %194 = vmatprep.subr.mxu0 0.0
  %195 = vmatpush1.msra.mxu0 0.0
  %196 = vmatprep.subr.mxu0 0.0
  %197 = vmatpush1.msra.mxu0 0.0
  %198 = vmatprep.subr.mxu0 0.0
  %199 = vmatpush1.msra.mxu0 0.0
  %200 = vmatprep.subr.mxu0 0.0
  %201 = vmatpush1.msra.mxu0 0.0
  %202 = vmatprep.subr.mxu0 0.0
  %203 = vmatpush1.msra.mxu0 0.0
  %204 = vmatprep.subr.mxu0 0.0
  %205 = vmatpush1.msra.mxu0 0.0
  %206 = vmatprep.subr.mxu0 0.0
  %207 = vmatpush1.msra.mxu0 0.0
  %208 = vmatprep.subr.mxu0 0.0
  %209 = vmatpush1.msra.mxu0 0.0
  %210 = vmatprep.subr.mxu0 0.0
  %211 = vmatpush1.msra.mxu0 0.0
  %212 = vmatprep.subr.mxu0 0.0
  %213 = vmatpush1.msra.mxu0 0.0
  %214 = vmatprep.subr.mxu0 0.0
  %215 = vmatpush1.msra.mxu0 0.0
  %216 = vmatprep.mubr.f32.mxu0 0.0
  %217 = vmatmul.mubr.f32.gmra.mrb[0].mxu0 %v129
  %v218 = vpop.f32.mrb[0].mxu0
  %v219 = vadd.f32 %v127, %v218
  %v220 = vpop.f32.mrb[0].mxu0
  %221 = vmatprep.mubr.f32.mxu0 0.0
  %222 = vmatmul.mubr.f32.gmra.mrb[0].mxu0 %v132
  %v223 = vpop.f32.mrb[0].mxu0
  %v224 = vadd.f32 %v127, %v223
  %v225 = vpop.f32.mrb[0].mxu0
  %226 = vmatprep.mubr.f32.mxu0 0.0
  %227 = vmatmul.mubr.f32.gmra.mrb[0].mxu0 %v135
  %v228 = vpop.f32.mrb[0].mxu0
  %v229 = vadd.f32 %v127, %v228
  %v230 = vpop.f32.mrb[0].mxu0
  %231 = vmatprep.mubr.f32.mxu0 0.0
  %232 = vmatmul.mubr.f32.gmra.mrb[0].mxu0 %v138
  %v233 = vpop.f32.mrb[0].mxu0
  %v234 = vadd.f32 %v127, %v233
  %v235 = vpop.f32.mrb[0].mxu0
  %236 = vmatprep.mubr.f32.mxu0 0.0
  %237 = vmatmul.mubr.f32.gmra.mrb[0].mxu0 %v141
  %v238 = vpop.f32.mrb[0].mxu0
  %v239 = vadd.f32 %v127, %v238
  %v240 = vpop.f32.mrb[0].mxu0
  %241 = vmatprep.mubr.f32.mxu0 0.0
  %242 = vmatmul.mubr.f32.gmra.mrb[0].mxu0 %v144
  %v243 = vpop.f32.mrb[0].mxu0
  %v244 = vadd.f32 %v127, %v243
  %v245 = vpop.f32.mrb[0].mxu0
  %246 = vmatprep.mubr.f32.mxu0 0.0
  %247 = vmatmul.mubr.f32.gmra.mrb[0].mxu0 %v147
  %v248 = vpop.f32.mrb[0].mxu0
  %v249 = vadd.f32 %v127, %v248
  %v250 = vpop.f32.mrb[0].mxu0
  %251 = vmatprep.mubr.f32.mxu0 0.0
  %252 = vmatmul.mubr.f32.gmra.mrb[0].mxu0 %v150
  %v253 = vpop.f32.mrb[0].mxu0
  %v254 = vadd.f32 %v127, %v253
  %v255 = vpop.f32.mrb[0].mxu0
  %256 = vdwg.mxu0
  %v258 = vcombine.high %v108, %v108
  %v260 = vunpack.c.l.s4 1966171168
  %v261 = vunpack.c.0.s8 %v260
  %v262 = vlaneseq
  %v263 = vshrl.u32 %v262, 7
  %v264 = vsub.s32 %v261, %v263
  %v265 = vrot.slane %v108, %v264
  %v267 = vunpack.c.l.s4 1966171168
  %v268 = vunpack.c.0.s8 %v267
  %v269 = vlaneseq
  %v270 = vshrl.u32 %v269, 7
  %v271 = vsub.s32 %v268, %v270
  %v272 = vrot.slane %v258, %v271
  %v273 = vcombine.high %v265, %v265
  %v274 = vcombine.high %v272, %v272
  %v276 = vunpack.c.l.s4 1966171168
  %v277 = vunpack.c.0.s8 %v276
  %v278 = vlaneseq
  %v279 = vshrl.u32 %v278, 7
  %v280 = vsub.s32 %v277, %v279
  %v281 = vrot.slane %v265, %v280
  %v283 = vunpack.c.l.s4 1966171168
  %v284 = vunpack.c.0.s8 %v283
  %v285 = vlaneseq
  %v286 = vshrl.u32 %v285, 7
  %v287 = vsub.s32 %v284, %v286
  %v288 = vrot.slane %v272, %v287
  %v290 = vunpack.c.l.s4 1966171168
  %v291 = vunpack.c.0.s8 %v290
  %v292 = vlaneseq
  %v293 = vshrl.u32 %v292, 7
  %v294 = vsub.s32 %v291, %v293
  %v295 = vrot.slane %v273, %v294
  %v297 = vunpack.c.l.s4 1966171168
  %v298 = vunpack.c.0.s8 %v297
  %v299 = vlaneseq
  %v300 = vshrl.u32 %v299, 7
  %v301 = vsub.s32 %v298, %v300
  %v302 = vrot.slane %v274, %v301
  %v303 = vcombine.high %v281, %v281
  %v304 = vcombine.high %v288, %v288
  %v305 = vcombine.high %v295, %v295
  %v306 = vcombine.high %v302, %v302
  %v307 = vlaneseq
  %v308 = vshrl.u32 %v307, 7
  %v309 = vsub.s32 0, %v308
  %v310 = vrot.slane %v281, %v309
  %v311 = vlaneseq
  %v312 = vshrl.u32 %v311, 7
  %v313 = vsub.s32 0, %v312
  %v314 = vrot.slane %v295, %v313
  %v315 = vlaneseq
  %v316 = vshrl.u32 %v315, 7
  %v317 = vsub.s32 0, %v316
  %v318 = vrot.slane %v303, %v317
  %v319 = vlaneseq
  %v320 = vshrl.u32 %v319, 7
  %v321 = vsub.s32 0, %v320
  %v322 = vrot.slane %v305, %v321
  %v323 = vlaneseq
  %v324 = vshrl.u32 %v323, 7
  %v325 = vsub.s32 0, %v324
  %v326 = vrot.slane %v288, %v325
  %v327 = vlaneseq
  %v328 = vshrl.u32 %v327, 7
  %v329 = vsub.s32 0, %v328
  %v330 = vrot.slane %v302, %v329
  %v331 = vlaneseq
  %v332 = vshrl.u32 %v331, 7
  %v333 = vsub.s32 0, %v332
  %v334 = vrot.slane %v304, %v333
  %v335 = vlaneseq
  %v336 = vshrl.u32 %v335, 7
  %v337 = vsub.s32 0, %v336
  %v338 = vrot.slane %v306, %v337
  %v347 = vmul.f32 %v310, %v219
  %v348 = vmul.f32 %v314, %v224
  %v349 = vmul.f32 %v318, %v229
  %v350 = vmul.f32 %v322, %v234
  %v351 = vmul.f32 %v326, %v239
  %v352 = vmul.f32 %v330, %v244
  %v353 = vmul.f32 %v334, %v249
  %v354 = vmul.f32 %v338, %v254
  %v356 = vsel %vm37, %v347, 0
  %v359 = vsel %vm37, %v348, 0
  %v362 = vsel %vm37, %v349, 0
  %v365 = vsel %vm37, %v350, 0
  %v368 = vsel %vm37, %v351, 0
  %v371 = vsel %vm37, %v352, 0
  %v374 = vsel %vm37, %v353, 0
  %v377 = vsel %vm37, %v354, 0
  %379 = vmatprep.subr.mxu0 0.0
  %380 = vmatpush1.msra.mxu0 %v23
  %381 = vmatprep.subr.mxu0 0.0
  %382 = vmatpush1.msra.mxu0 %v24
  %383 = vmatprep.subr.mxu0 0.0
  %384 = vmatpush1.msra.mxu0 %v25
  %385 = vmatprep.subr.mxu0 0.0
  %386 = vmatpush1.msra.mxu0 %v26
  %387 = vmatprep.subr.mxu0 0.0
  %388 = vmatpush1.msra.mxu0 0.0
  %389 = vmatprep.subr.mxu0 0.0
  %390 = vmatpush1.msra.mxu0 0.0
  %391 = vmatprep.subr.mxu0 0.0
  %392 = vmatpush1.msra.mxu0 0.0
  %393 = vmatprep.subr.mxu0 0.0
  %394 = vmatpush1.msra.mxu0 0.0
  %395 = vmatprep.subr.mxu0 0.0
  %396 = vmatpush1.msra.mxu0 0.0
  %397 = vmatprep.subr.mxu0 0.0
  %398 = vmatpush1.msra.mxu0 0.0
  %399 = vmatprep.subr.mxu0 0.0
  %400 = vmatpush1.msra.mxu0 0.0
  %401 = vmatprep.subr.mxu0 0.0
  %402 = vmatpush1.msra.mxu0 0.0
  %403 = vmatprep.subr.mxu0 0.0
  %404 = vmatpush1.msra.mxu0 0.0
  %405 = vmatprep.subr.mxu0 0.0
  %406 = vmatpush1.msra.mxu0 0.0
  %407 = vmatprep.subr.mxu0 0.0
  %408 = vmatpush1.msra.mxu0 0.0
  %409 = vmatprep.subr.mxu0 0.0
  %410 = vmatpush1.msra.mxu0 0.0
  %411 = vmatprep.subr.mxu0 0.0
  %412 = vmatpush1.msra.mxu0 0.0
  %413 = vmatprep.subr.mxu0 0.0
  %414 = vmatpush1.msra.mxu0 0.0
  %415 = vmatprep.subr.mxu0 0.0
  %416 = vmatpush1.msra.mxu0 0.0
  %417 = vmatprep.subr.mxu0 0.0
  %418 = vmatpush1.msra.mxu0 0.0
  %419 = vmatprep.subr.mxu0 0.0
  %420 = vmatpush1.msra.mxu0 0.0
  %421 = vmatprep.subr.mxu0 0.0
  %422 = vmatpush1.msra.mxu0 0.0
  %423 = vmatprep.subr.mxu0 0.0
  %424 = vmatpush1.msra.mxu0 0.0
  %425 = vmatprep.subr.mxu0 0.0
  %426 = vmatpush1.msra.mxu0 0.0
  %427 = vmatprep.subr.mxu0 0.0
  %428 = vmatpush1.msra.mxu0 0.0
  %429 = vmatprep.subr.mxu0 0.0
  %430 = vmatpush1.msra.mxu0 0.0
  %431 = vmatprep.subr.mxu0 0.0
  %432 = vmatpush1.msra.mxu0 0.0
  %433 = vmatprep.subr.mxu0 0.0
  %434 = vmatpush1.msra.mxu0 0.0
  %435 = vmatprep.subr.mxu0 0.0
  %436 = vmatpush1.msra.mxu0 0.0
  %437 = vmatprep.subr.mxu0 0.0
  %438 = vmatpush1.msra.mxu0 0.0
  %439 = vmatprep.subr.mxu0 0.0
  %440 = vmatpush1.msra.mxu0 0.0
  %441 = vmatprep.subr.mxu0 0.0
  %442 = vmatpush1.msra.mxu0 0.0
  %443 = vmatprep.mubr.f32.mxu0 0.0
  %444 = vmatmul.mubr.f32.gmra.mrb[0].mxu0 %v356
  %v445 = vpop.f32.mrb[0].mxu0
  %v446 = vadd.f32 0.0, %v445
  %v447 = vpop.f32.mrb[0].mxu0
  %448 = vmatprep.mubr.f32.mxu0 0.0
  %449 = vmatmul.mubr.f32.gmra.mrb[0].mxu0 %v359
  %v450 = vpop.f32.mrb[0].mxu0
  %v451 = vadd.f32 0.0, %v450
  %v452 = vpop.f32.mrb[0].mxu0
  %453 = vmatprep.mubr.f32.mxu0 0.0
  %454 = vmatmul.mubr.f32.gmra.mrb[0].mxu0 %v362
  %v455 = vpop.f32.mrb[0].mxu0
  %v456 = vadd.f32 0.0, %v455
  %v457 = vpop.f32.mrb[0].mxu0
  %458 = vmatprep.mubr.f32.mxu0 0.0
  %459 = vmatmul.mubr.f32.gmra.mrb[0].mxu0 %v365
  %v460 = vpop.f32.mrb[0].mxu0
  %v461 = vadd.f32 0.0, %v460
  %v462 = vpop.f32.mrb[0].mxu0
  %463 = vmatprep.mubr.f32.mxu0 0.0
  %464 = vmatmul.mubr.f32.gmra.mrb[0].mxu0 %v368
  %v465 = vpop.f32.mrb[0].mxu0
  %v466 = vadd.f32 0.0, %v465
  %v467 = vpop.f32.mrb[0].mxu0
  %468 = vmatprep.mubr.f32.mxu0 0.0
  %469 = vmatmul.mubr.f32.gmra.mrb[0].mxu0 %v371
  %v470 = vpop.f32.mrb[0].mxu0
  %v471 = vadd.f32 0.0, %v470
  %v472 = vpop.f32.mrb[0].mxu0
  %473 = vmatprep.mubr.f32.mxu0 0.0
  %474 = vmatmul.mubr.f32.gmra.mrb[0].mxu0 %v374
  %v475 = vpop.f32.mrb[0].mxu0
  %v476 = vadd.f32 0.0, %v475
  %v477 = vpop.f32.mrb[0].mxu0
  %478 = vmatprep.mubr.f32.mxu0 0.0
  %479 = vmatmul.mubr.f32.gmra.mrb[0].mxu0 %v377
  %v480 = vpop.f32.mrb[0].mxu0
  %v481 = vadd.f32 0.0, %v480
  %v482 = vpop.f32.mrb[0].mxu0
  %483 = vdwg.mxu0
  %vm484 = vcmask 31744
  %v485 = vsel %vm484, %v446, -inf
  %v486 = vrot.slane %v485, 4
  %v487 = vmax.f32 %v485, %v486
  %v488 = vrot.slane %v487, 2
  %v489 = vmax.f32 %v487, %v488
  %v490 = vrot.slane %v489, 1
  %v491 = vmax.f32 %v489, %v490
  %v492 = vsel %vm484, %v451, -inf
  %v493 = vrot.slane %v492, 4
  %v494 = vmax.f32 %v492, %v493
  %v495 = vrot.slane %v494, 2
  %v496 = vmax.f32 %v494, %v495
  %v497 = vrot.slane %v496, 1
  %v498 = vmax.f32 %v496, %v497
  %v499 = vsel %vm484, %v456, -inf
  %v500 = vrot.slane %v499, 4
  %v501 = vmax.f32 %v499, %v500
  %v502 = vrot.slane %v501, 2
  %v503 = vmax.f32 %v501, %v502
  %v504 = vrot.slane %v503, 1
  %v505 = vmax.f32 %v503, %v504
  %v506 = vsel %vm484, %v461, -inf
  %v507 = vrot.slane %v506, 4
  %v508 = vmax.f32 %v506, %v507
  %v509 = vrot.slane %v508, 2
  %v510 = vmax.f32 %v508, %v509
  %v511 = vrot.slane %v510, 1
  %v512 = vmax.f32 %v510, %v511
  %v513 = vsel %vm484, %v466, -inf
  %v514 = vrot.slane %v513, 4
  %v515 = vmax.f32 %v513, %v514
  %v516 = vrot.slane %v515, 2
  %v517 = vmax.f32 %v515, %v516
  %v518 = vrot.slane %v517, 1
  %v519 = vmax.f32 %v517, %v518
  %v520 = vsel %vm484, %v471, -inf
  %v521 = vrot.slane %v520, 4
  %v522 = vmax.f32 %v520, %v521
  %v523 = vrot.slane %v522, 2
  %v524 = vmax.f32 %v522, %v523
  %v525 = vrot.slane %v524, 1
  %v526 = vmax.f32 %v524, %v525
  %v527 = vsel %vm484, %v476, -inf
  %v528 = vrot.slane %v527, 4
  %v529 = vmax.f32 %v527, %v528
  %v530 = vrot.slane %v529, 2
  %v531 = vmax.f32 %v529, %v530
  %v532 = vrot.slane %v531, 1
  %v533 = vmax.f32 %v531, %v532
  %v534 = vsel %vm484, %v481, -inf
  %v535 = vrot.slane %v534, 4
  %v536 = vmax.f32 %v534, %v535
  %v537 = vrot.slane %v536, 2
  %v538 = vmax.f32 %v536, %v537
  %v539 = vrot.slane %v538, 1
  %v540 = vmax.f32 %v538, %v539
  %v541 = vsub.f32 %v446, %v491
  %v542 = vsub.f32 %v451, %v498
  %v543 = vsub.f32 %v456, %v505
  %v544 = vsub.f32 %v461, %v512
  %v545 = vsub.f32 %v466, %v519
  %v546 = vsub.f32 %v471, %v526
  %v547 = vsub.f32 %v476, %v533
  %v548 = vsub.f32 %v481, %v540
  %v549 = vmul.f32 %v541, 1.442695
  %v550 = vpow.pop %v549
  %v551 = vmul.f32 %v542, 1.442695
  %v552 = vpow.pop %v551
  %v553 = vmul.f32 %v543, 1.442695
  %v554 = vpow.pop %v553
  %v555 = vmul.f32 %v544, 1.442695
  %v556 = vpow.pop %v555
  %v557 = vmul.f32 %v545, 1.442695
  %v558 = vpow.pop %v557
  %v559 = vmul.f32 %v546, 1.442695
  %v560 = vpow.pop %v559
  %v561 = vmul.f32 %v547, 1.442695
  %v562 = vpow.pop %v561
  %v563 = vmul.f32 %v548, 1.442695
  %v564 = vpow.pop %v563
  %v565 = vsel %vm484, %v550, 0.0
  %v566 = vrot.slane %v565, 4
  %v567 = vadd.f32 %v565, %v566
  %v568 = vrot.slane %v567, 2
  %v569 = vadd.f32 %v567, %v568
  %v570 = vrot.slane %v569, 1
  %v571 = vadd.f32 %v569, %v570
  %v572 = vsel %vm484, %v552, 0.0
  %v573 = vrot.slane %v572, 4
  %v574 = vadd.f32 %v572, %v573
  %v575 = vrot.slane %v574, 2
  %v576 = vadd.f32 %v574, %v575
  %v577 = vrot.slane %v576, 1
  %v578 = vadd.f32 %v576, %v577
  %v579 = vsel %vm484, %v554, 0.0
  %v580 = vrot.slane %v579, 4
  %v581 = vadd.f32 %v579, %v580
  %v582 = vrot.slane %v581, 2
  %v583 = vadd.f32 %v581, %v582
  %v584 = vrot.slane %v583, 1
  %v585 = vadd.f32 %v583, %v584
  %v586 = vsel %vm484, %v556, 0.0
  %v587 = vrot.slane %v586, 4
  %v588 = vadd.f32 %v586, %v587
  %v589 = vrot.slane %v588, 2
  %v590 = vadd.f32 %v588, %v589
  %v591 = vrot.slane %v590, 1
  %v592 = vadd.f32 %v590, %v591
  %v593 = vsel %vm484, %v558, 0.0
  %v594 = vrot.slane %v593, 4
  %v595 = vadd.f32 %v593, %v594
  %v596 = vrot.slane %v595, 2
  %v597 = vadd.f32 %v595, %v596
  %v598 = vrot.slane %v597, 1
  %v599 = vadd.f32 %v597, %v598
  %v600 = vsel %vm484, %v560, 0.0
  %v601 = vrot.slane %v600, 4
  %v602 = vadd.f32 %v600, %v601
  %v603 = vrot.slane %v602, 2
  %v604 = vadd.f32 %v602, %v603
  %v605 = vrot.slane %v604, 1
  %v606 = vadd.f32 %v604, %v605
  %v607 = vsel %vm484, %v562, 0.0
  %v608 = vrot.slane %v607, 4
  %v609 = vadd.f32 %v607, %v608
  %v610 = vrot.slane %v609, 2
  %v611 = vadd.f32 %v609, %v610
  %v612 = vrot.slane %v611, 1
  %v613 = vadd.f32 %v611, %v612
  %v614 = vsel %vm484, %v564, 0.0
  %v615 = vrot.slane %v614, 4
  %v616 = vadd.f32 %v614, %v615
  %v617 = vrot.slane %v616, 2
  %v618 = vadd.f32 %v616, %v617
  %v619 = vrot.slane %v618, 1
  %v620 = vadd.f32 %v618, %v619
  %v621 = vrcp.pop %v571
  %v622 = vrcp.pop %v578
  %v623 = vrcp.pop %v585
  %v624 = vrcp.pop %v592
  %v625 = vrcp.pop %v599
  %v626 = vrcp.pop %v606
  %v627 = vrcp.pop %v613
  %v628 = vrcp.pop %v620
  %v629 = vmul.f32 %v550, %v621
  %v630 = vmul.f32 %v552, %v622
  %v631 = vmul.f32 %v554, %v623
  %v632 = vmul.f32 %v556, %v624
  %v633 = vmul.f32 %v558, %v625
  %v634 = vmul.f32 %v560, %v626
  %v635 = vmul.f32 %v562, %v627
  %v636 = vmul.f32 %v564, %v628
  %v638 = vsel %vm484, %v629, 0
  %v641 = vsel %vm484, %v630, 0
  %v644 = vsel %vm484, %v631, 0
  %v647 = vsel %vm484, %v632, 0
  %v650 = vsel %vm484, %v633, 0
  %v653 = vsel %vm484, %v634, 0
  %v656 = vsel %vm484, %v635, 0
  %v659 = vsel %vm484, %v636, 0
  %v662 = vsel %vm484, %v23, 0
  %v665 = vsel %vm484, %v24, 0
  %v668 = vsel %vm484, %v25, 0
  %v671 = vsel %vm484, %v26, 0
  %673 = vmatprep.subr.mxu0 0.0
  %674 = vmatpush1.xpose.msra.mxu0 %v662
  %675 = vmatprep.subr.mxu0 0.0
  %676 = vmatpush1.xpose.msra.mxu0 %v665
  %677 = vmatprep.subr.mxu0 0.0
  %678 = vmatpush1.xpose.msra.mxu0 %v668
  %679 = vmatprep.subr.mxu0 0.0
  %680 = vmatpush1.xpose.msra.mxu0 %v671
  %681 = vmatprep.subr.mxu0 0.0
  %682 = vmatpush1.xpose.msra.mxu0 0.0
  %683 = vmatprep.subr.mxu0 0.0
  %684 = vmatpush1.xpose.msra.mxu0 0.0
  %685 = vmatprep.subr.mxu0 0.0
  %686 = vmatpush1.xpose.msra.mxu0 0.0
  %687 = vmatprep.subr.mxu0 0.0
  %688 = vmatpush1.xpose.msra.mxu0 0.0
  %689 = vmatprep.subr.mxu0 0.0
  %690 = vmatpush1.xpose.msra.mxu0 0.0
  %691 = vmatprep.subr.mxu0 0.0
  %692 = vmatpush1.xpose.msra.mxu0 0.0
  %693 = vmatprep.subr.mxu0 0.0
  %694 = vmatpush1.xpose.msra.mxu0 0.0
  %695 = vmatprep.subr.mxu0 0.0
  %696 = vmatpush1.xpose.msra.mxu0 0.0
  %697 = vmatprep.subr.mxu0 0.0
  %698 = vmatpush1.xpose.msra.mxu0 0.0
  %699 = vmatprep.subr.mxu0 0.0
  %700 = vmatpush1.xpose.msra.mxu0 0.0
  %701 = vmatprep.subr.mxu0 0.0
  %702 = vmatpush1.xpose.msra.mxu0 0.0
  %703 = vmatprep.subr.mxu0 0.0
  %704 = vmatpush1.xpose.msra.mxu0 0.0
  %705 = vmatprep.subr.mxu0 0.0
  %706 = vmatpush1.xpose.msra.mxu0 0.0
  %707 = vmatprep.subr.mxu0 0.0
  %708 = vmatpush1.xpose.msra.mxu0 0.0
  %709 = vmatprep.subr.mxu0 0.0
  %710 = vmatpush1.xpose.msra.mxu0 0.0
  %711 = vmatprep.subr.mxu0 0.0
  %712 = vmatpush1.xpose.msra.mxu0 0.0
  %713 = vmatprep.subr.mxu0 0.0
  %714 = vmatpush1.xpose.msra.mxu0 0.0
  %715 = vmatprep.subr.mxu0 0.0
  %716 = vmatpush1.xpose.msra.mxu0 0.0
  %717 = vmatprep.subr.mxu0 0.0
  %718 = vmatpush1.xpose.msra.mxu0 0.0
  %719 = vmatprep.subr.mxu0 0.0
  %720 = vmatpush1.xpose.msra.mxu0 0.0
  %721 = vmatprep.subr.mxu0 0.0
  %722 = vmatpush1.xpose.msra.mxu0 0.0
  %723 = vmatprep.subr.mxu0 0.0
  %724 = vmatpush1.xpose.msra.mxu0 0.0
  %725 = vmatprep.subr.mxu0 0.0
  %726 = vmatpush1.xpose.msra.mxu0 0.0
  %727 = vmatprep.subr.mxu0 0.0
  %728 = vmatpush1.xpose.msra.mxu0 0.0
  %729 = vmatprep.subr.mxu0 0.0
  %730 = vmatpush1.xpose.msra.mxu0 0.0
  %731 = vmatprep.subr.mxu0 0.0
  %732 = vmatpush1.xpose.msra.mxu0 0.0
  %733 = vmatprep.subr.mxu0 0.0
  %734 = vmatpush1.xpose.msra.mxu0 0.0
  %735 = vmatprep.subr.mxu0 0.0
  %736 = vmatpush1.xpose.msra.mxu0 0.0
  %737 = vmatprep.mubr.f32.mxu0 0.0
  %738 = vmatmul.mubr.f32.gmra.mrb[0].mxu0 %v638
  %v739 = vpop.f32.mrb[0].mxu0
  %v740 = vadd.f32 0.0, %v739
  %v741 = vpop.f32.mrb[0].mxu0
  %742 = vmatprep.mubr.f32.mxu0 0.0
  %743 = vmatmul.mubr.f32.gmra.mrb[0].mxu0 %v641
  %v744 = vpop.f32.mrb[0].mxu0
  %v745 = vadd.f32 0.0, %v744
  %v746 = vpop.f32.mrb[0].mxu0
  %747 = vmatprep.mubr.f32.mxu0 0.0
  %748 = vmatmul.mubr.f32.gmra.mrb[0].mxu0 %v644
  %v749 = vpop.f32.mrb[0].mxu0
  %v750 = vadd.f32 0.0, %v749
  %v751 = vpop.f32.mrb[0].mxu0
  %752 = vmatprep.mubr.f32.mxu0 0.0
  %753 = vmatmul.mubr.f32.gmra.mrb[0].mxu0 %v647
  %v754 = vpop.f32.mrb[0].mxu0
  %v755 = vadd.f32 0.0, %v754
  %v756 = vpop.f32.mrb[0].mxu0
  %757 = vmatprep.mubr.f32.mxu0 0.0
  %758 = vmatmul.mubr.f32.gmra.mrb[0].mxu0 %v650
  %v759 = vpop.f32.mrb[0].mxu0
  %v760 = vadd.f32 0.0, %v759
  %v761 = vpop.f32.mrb[0].mxu0
  %762 = vmatprep.mubr.f32.mxu0 0.0
  %763 = vmatmul.mubr.f32.gmra.mrb[0].mxu0 %v653
  %v764 = vpop.f32.mrb[0].mxu0
  %v765 = vadd.f32 0.0, %v764
  %v766 = vpop.f32.mrb[0].mxu0
  %767 = vmatprep.mubr.f32.mxu0 0.0
  %768 = vmatmul.mubr.f32.gmra.mrb[0].mxu0 %v656
  %v769 = vpop.f32.mrb[0].mxu0
  %v770 = vadd.f32 0.0, %v769
  %v771 = vpop.f32.mrb[0].mxu0
  %772 = vmatprep.mubr.f32.mxu0 0.0
  %773 = vmatmul.mubr.f32.gmra.mrb[0].mxu0 %v659
  %v774 = vpop.f32.mrb[0].mxu0
  %v775 = vadd.f32 0.0, %v774
  %v776 = vpop.f32.mrb[0].mxu0
  %777 = vdwg.mxu0
  %v778 = vld [vmem:[%s2] sm:$0xff]
  %v779 = vmul.f32 %v740, %v778
  %v780 = vmul.f32 %v745, %v778
  %v781 = vmul.f32 %v750, %v778
  %v782 = vmul.f32 %v755, %v778
  %v783 = vmul.f32 %v760, %v778
  %v784 = vmul.f32 %v765, %v778
  %v785 = vmul.f32 %v770, %v778
  %v786 = vmul.f32 %v775, %v778
  %v787 = vsel %vm37, %v779, 0.0
  %v788 = vrot.slane %v787, 4
  %v789 = vadd.f32 %v787, %v788
  %v790 = vrot.slane %v789, 2
  %v791 = vadd.f32 %v789, %v790
  %v792 = vrot.slane %v791, 1
  %v793 = vadd.f32 %v791, %v792
  %v794 = vsel %vm37, %v780, 0.0
  %v795 = vrot.slane %v794, 4
  %v796 = vadd.f32 %v794, %v795
  %v797 = vrot.slane %v796, 2
  %v798 = vadd.f32 %v796, %v797
  %v799 = vrot.slane %v798, 1
  %v800 = vadd.f32 %v798, %v799
  %v801 = vsel %vm37, %v781, 0.0
  %v802 = vrot.slane %v801, 4
  %v803 = vadd.f32 %v801, %v802
  %v804 = vrot.slane %v803, 2
  %v805 = vadd.f32 %v803, %v804
  %v806 = vrot.slane %v805, 1
  %v807 = vadd.f32 %v805, %v806
  %v808 = vsel %vm37, %v782, 0.0
  %v809 = vrot.slane %v808, 4
  %v810 = vadd.f32 %v808, %v809
  %v811 = vrot.slane %v810, 2
  %v812 = vadd.f32 %v810, %v811
  %v813 = vrot.slane %v812, 1
  %v814 = vadd.f32 %v812, %v813
  %v815 = vsel %vm37, %v783, 0.0
  %v816 = vrot.slane %v815, 4
  %v817 = vadd.f32 %v815, %v816
  %v818 = vrot.slane %v817, 2
  %v819 = vadd.f32 %v817, %v818
  %v820 = vrot.slane %v819, 1
  %v821 = vadd.f32 %v819, %v820
  %v822 = vsel %vm37, %v784, 0.0
  %v823 = vrot.slane %v822, 4
  %v824 = vadd.f32 %v822, %v823
  %v825 = vrot.slane %v824, 2
  %v826 = vadd.f32 %v824, %v825
  %v827 = vrot.slane %v826, 1
  %v828 = vadd.f32 %v826, %v827
  %v829 = vsel %vm37, %v785, 0.0
  %v830 = vrot.slane %v829, 4
  %v831 = vadd.f32 %v829, %v830
  %v832 = vrot.slane %v831, 2
  %v833 = vadd.f32 %v831, %v832
  %v834 = vrot.slane %v833, 1
  %v835 = vadd.f32 %v833, %v834
  %v836 = vsel %vm37, %v786, 0.0
  %v837 = vrot.slane %v836, 4
  %v838 = vadd.f32 %v836, %v837
  %v839 = vrot.slane %v838, 2
  %v840 = vadd.f32 %v838, %v839
  %v841 = vrot.slane %v840, 1
  %v842 = vadd.f32 %v840, %v841
  %v843 = vld [vmem:[%s4 + $0x40] sm:$0xff]
  %v844 = vld [vmem:[%s4 + $0x48] sm:$0xff]
  %v845 = vld [vmem:[%s4 + $0x50] sm:$0xff]
  %v846 = vld [vmem:[%s4 + $0x58] sm:$0xff]
  %v847 = vld [vmem:[%s5 + $0x2] sm:$0x1]
  %v848 = vlaneseq
  %v849 = vshrl.u32 %v848, 7
  %v850 = vsub.s32 0, %v849
  %v851 = vrot.slane %v847, %v850
  %vm860 = vcmask 1041409
  %v861 = vsel %vm860, %v800, %v793
  %vm862 = vcmask 1042434
  %v863 = vsel %vm862, %v807, %v861
  %vm864 = vcmask 1043459
  %v865 = vsel %vm864, %v814, %v863
  %vm866 = vcmask 1044484
  %v867 = vsel %vm866, %v821, %v865
  %vm868 = vcmask 1045509
  %v869 = vsel %vm868, %v828, %v867
  %vm870 = vcmask 1046534
  %v871 = vsel %vm870, %v835, %v869
  %vm872 = vcmask 1047559
  %v873 = vsel %vm872, %v842, %v871
  %v874 = vsel %vm37, %v873, 0
  %876 = vmatprep.subr.mxu0 0.0
  %877 = vmatpush1.msra.mxu0 %v843
  %878 = vmatprep.subr.mxu0 0.0
  %879 = vmatpush1.msra.mxu0 %v844
  %880 = vmatprep.subr.mxu0 0.0
  %881 = vmatpush1.msra.mxu0 %v845
  %882 = vmatprep.subr.mxu0 0.0
  %883 = vmatpush1.msra.mxu0 %v846
  %884 = vmatprep.subr.mxu0 0.0
  %885 = vmatpush1.msra.mxu0 0.0
  %886 = vmatprep.subr.mxu0 0.0
  %887 = vmatpush1.msra.mxu0 0.0
  %888 = vmatprep.subr.mxu0 0.0
  %889 = vmatpush1.msra.mxu0 0.0
  %890 = vmatprep.subr.mxu0 0.0
  %891 = vmatpush1.msra.mxu0 0.0
  %892 = vmatprep.subr.mxu0 0.0
  %893 = vmatpush1.msra.mxu0 0.0
  %894 = vmatprep.subr.mxu0 0.0
  %895 = vmatpush1.msra.mxu0 0.0
  %896 = vmatprep.subr.mxu0 0.0
  %897 = vmatpush1.msra.mxu0 0.0
  %898 = vmatprep.subr.mxu0 0.0
  %899 = vmatpush1.msra.mxu0 0.0
  %900 = vmatprep.subr.mxu0 0.0
  %901 = vmatpush1.msra.mxu0 0.0
  %902 = vmatprep.subr.mxu0 0.0
  %903 = vmatpush1.msra.mxu0 0.0
  %904 = vmatprep.subr.mxu0 0.0
  %905 = vmatpush1.msra.mxu0 0.0
  %906 = vmatprep.subr.mxu0 0.0
  %907 = vmatpush1.msra.mxu0 0.0
  %908 = vmatprep.subr.mxu0 0.0
  %909 = vmatpush1.msra.mxu0 0.0
  %910 = vmatprep.subr.mxu0 0.0
  %911 = vmatpush1.msra.mxu0 0.0
  %912 = vmatprep.subr.mxu0 0.0
  %913 = vmatpush1.msra.mxu0 0.0
  %914 = vmatprep.subr.mxu0 0.0
  %915 = vmatpush1.msra.mxu0 0.0
  %916 = vmatprep.subr.mxu0 0.0
  %917 = vmatpush1.msra.mxu0 0.0
  %918 = vmatprep.subr.mxu0 0.0
  %919 = vmatpush1.msra.mxu0 0.0
  %920 = vmatprep.subr.mxu0 0.0
  %921 = vmatpush1.msra.mxu0 0.0
  %922 = vmatprep.subr.mxu0 0.0
  %923 = vmatpush1.msra.mxu0 0.0
  %924 = vmatprep.subr.mxu0 0.0
  %925 = vmatpush1.msra.mxu0 0.0
  %926 = vmatprep.subr.mxu0 0.0
  %927 = vmatpush1.msra.mxu0 0.0
  %928 = vmatprep.subr.mxu0 0.0
  %929 = vmatpush1.msra.mxu0 0.0
  %930 = vmatprep.subr.mxu0 0.0
  %931 = vmatpush1.msra.mxu0 0.0
  %932 = vmatprep.subr.mxu0 0.0
  %933 = vmatpush1.msra.mxu0 0.0
  %934 = vmatprep.subr.mxu0 0.0
  %935 = vmatpush1.msra.mxu0 0.0
  %936 = vmatprep.subr.mxu0 0.0
  %937 = vmatpush1.msra.mxu0 0.0
  %938 = vmatprep.subr.mxu0 0.0
  %939 = vmatpush1.msra.mxu0 0.0
  %940 = vmatprep.mubr.f32.mxu0 0.0
  %941 = vmatmul.mubr.f32.gmra.mrb[0].mxu0 %v874
  %v942 = vpop.f32.mrb[0].mxu0
  %v943 = vadd.f32 %v851, %v942
  %v944 = vpop.f32.mrb[0].mxu0
  %945 = vdwg.mxu0
  %946 = vst.msk [vmem:[%s6] sm:$0xff] %vm37, %v943
  // Predicated region
  $region26: #{scorer_selector_forward_batched.1} parent=0 // pred_check
    _
  $region27: #{scorer_selector_forward_batched.1} parent=0 // pred_check_branch
    %948 = sbr.rel (0) target = $region29
  $region28: #{scorer_selector_forward_batched.1} parent=0 // pred_region
    _
  $region29: #{scorer_selector_forward_batched.1} parent=0 // pred_fallthru
    _
  // Predicated region
  $region30: #{scorer_selector_forward_batched.1} parent=0 // pred_check
    _
  $region31: #{scorer_selector_forward_batched.1} parent=0 // pred_check_branch
    %950 = sbr.rel (0) target = $region33
  $region32: #{scorer_selector_forward_batched.1} parent=0 // pred_region
    _
  $region33: #{scorer_selector_forward_batched.1} parent=0 // pred_fallthru
    _

</llo_original>
